<compile_context>
chip_gen: v6e
topology: v6e:2x2x1
jax: 0.10.0
libtpu: 0.0.40
codegen_flags: <defaults>
</compile_context>

<pallas_src>
import functools
import math

import jax
import jax.numpy as jnp
from jax.experimental import pallas as pl
from jax.experimental.pallas import tpu as pltpu

EPS = 1e-6  # matches torch.nn.functional.pairwise_distance default


def _round_up(x, m):
    return ((x + m - 1) // m) * m


def _dneg_sq_kernel(img_ref, txt_ref, r_ref, c_ref, out_ref, *, tm, tn, batch):
    """Accumulate min_{j != i, j < batch} ||img_i - txt_j + eps||^2 per row.

    out_ref (tm, 1) is the running accumulator across the column (j) grid axis.
    """
    i = pl.program_id(0)   # row block (parallel)
    j = pl.program_id(1)   # column block (reduction axis)

    @pl.when(j == 0)
    def _init():
        out_ref[...] = jnp.full(out_ref.shape, jnp.inf, out_ref.dtype)

    # Cross term on the MXU: contract the last dims of both operands directly
    # (no explicit transpose), operands in native dtype, f32 accumulation.
    cross = jax.lax.dot_general(
        img_ref[...], txt_ref[...], (((1,), (1,)), ((), ())),
        preferred_element_type=jnp.float32)                         # (tm, tn)

    # ||img_i - txt_j + eps||^2 from the hoisted row/column statistics.
    d2 = (c_ref[...] - 2.0 * cross) + r_ref[...]                    # (tm, tn)

    row0 = i * tm
    col0 = j * tn
    # Does this tile intersect the global diagonal (positive pairs)?
    diag_hits = jnp.logical_and(row0 < col0 + tn, col0 < row0 + tm)
    # Does this tile contain padded columns (global col >= batch)?
    pad_hits = col0 + tn > batch
    needs_mask = jnp.logical_or(diag_hits, pad_hits)

    def _fold(tile):
        out_ref[...] = jnp.minimum(
            out_ref[...], jnp.min(tile, axis=-1, keepdims=True))

    @pl.when(needs_mask)
    def _masked():
        g_row = row0 + jax.lax.broadcasted_iota(jnp.int32, (tm, tn), 0)
        g_col = col0 + jax.lax.broadcasted_iota(jnp.int32, (tm, tn), 1)
        invalid = jnp.logical_or(g_row == g_col, g_col >= batch)
        _fold(jnp.where(invalid, jnp.inf, d2))

    @pl.when(jnp.logical_not(needs_mask))
    def _plain():
        _fold(d2)


def _pick_tiles(B, D, itemsize):
    """Return (tm, tn, b_pad) honoring the (8,128)/full-dim tiling rules."""
    b8 = _round_up(B, 8)
    if b8 <= 512 and b8 * D * itemsize <= 6 * 1024 * 1024:
        # Single tile: whole problem in VMEM.
        return b8, b8, b8
    b256 = _round_up(B, 256)
    if b256 <= 2048 and b256 * D * itemsize <= 6 * 1024 * 1024:
        # Whole txt matrix VMEM-resident (single column tile): each input is
        # then streamed from HBM exactly once; n_i >= 2 keeps both v7x cores busy.
        return 256, b256, b256
    # Large problem: stream 256-wide txt tiles against 512-row img tiles.
    return 512, 256, _round_up(B, 512)


def triplet_loss_pallas(all_image_features, all_text_features,
                        logit_scale=None, labels=None, margin=1.0,
                        tm=None, tn=None):
    """Pallas implementation of Triplet_Loss.forward.

    logit_scale and labels are accepted but unused (same as the PyTorch module).
    tm/tn optionally override the automatic tile selection (tn must be a
    multiple of 128 or equal to the padded batch).
    """
    del logit_scale, labels
    B, D = all_image_features.shape
    assert all_text_features.shape == (B, D)

    img = all_image_features
    txt = all_text_features
    img_f = img.astype(jnp.float32)
    txt_f = txt.astype(jnp.float32)

    # ---- Hoisted statistics (computed once, not per column tile) ----------
    r = (jnp.sum(img_f * img_f, axis=-1, keepdims=True)
         + (2.0 * EPS) * jnp.sum(img_f, axis=-1, keepdims=True)
         + jnp.float32(D) * jnp.float32(EPS * EPS))                 # (B, 1)
    c = (jnp.sum(txt_f * txt_f, axis=-1)
         - (2.0 * EPS) * jnp.sum(txt_f, axis=-1))[None, :]          # (1, B)

    # Exact positive distances (rowwise, plain JAX; no kernel stream needed).
    diff = img_f - txt_f + jnp.float32(EPS)
    d_pos = jnp.sqrt(jnp.sum(diff * diff, axis=-1))                 # (B,)

    itemsize = jnp.dtype(img.dtype).itemsize
    if tm is None or tn is None:
        tm, tn, b_pad = _pick_tiles(B, D, itemsize)
    else:
        b_pad = _round_up(B, math.lcm(tm, tn))

    if b_pad != B:
        pad_r = b_pad - B
        img = jnp.pad(img, ((0, pad_r), (0, 0)))
        txt = jnp.pad(txt, ((0, pad_r), (0, 0)))
        r = jnp.pad(r, ((0, pad_r), (0, 0)))
        c = jnp.pad(c, ((0, 0), (0, pad_r)))

    n_i = b_pad // tm
    n_j = b_pad // tn

    kernel = functools.partial(_dneg_sq_kernel, tm=tm, tn=tn, batch=B)

    # VMEM budget: double-buffered inputs + stats + a few (tm,tn) f32 tiles.
    est = (2 * (tm + tn) * D * itemsize + 2 * (tm + tn) * 4
           + 2 * tm * 4 + 4 * tm * tn * 4)
    vmem_limit = int(min(48 * 1024 * 1024, max(32 * 1024 * 1024, 2 * est)))

    dneg_sq = pl.pallas_call(
        kernel,
        out_shape=jax.ShapeDtypeStruct((b_pad, 1), jnp.float32),
        grid_spec=pltpu.PrefetchScalarGridSpec(
            num_scalar_prefetch=0,
            grid=(n_i, n_j),
            in_specs=[
                pl.BlockSpec((tm, D), lambda i, j: (i, 0)),   # img rows
                pl.BlockSpec((tn, D), lambda i, j: (j, 0)),   # txt columns (negatives)
                pl.BlockSpec((tm, 1), lambda i, j: (i, 0)),   # row stats r
                pl.BlockSpec((1, tn), lambda i, j: (0, j)),   # col stats c
            ],
            out_specs=pl.BlockSpec((tm, 1), lambda i, j: (i, 0)),
        ),
        compiler_params=pltpu.CompilerParams(
            dimension_semantics=("parallel", "arbitrary"),
            vmem_limit_bytes=vmem_limit),
    )(img, txt, r, c)

    # Finalize in the wrapper: sqrt / relu / mean over the (B,) valid rows.
    d_neg = jnp.sqrt(jnp.maximum(dneg_sq[:B, 0], 0.0))
    loss = jnp.mean(jnp.maximum(d_pos - d_neg + jnp.float32(margin), 0.0))
    return {'triplet_loss': loss}


def _triplet_loss_ref(img, txt, margin=1.0):
    """Pure-JAX reference mirroring the PyTorch loop semantics."""
    B = img.shape[0]
    diff = img[:, None, :].astype(jnp.float32) \
        - txt[None, :, :].astype(jnp.float32) + EPS                 # (B, B, D)
    dist = jnp.sqrt(jnp.sum(diff * diff, axis=-1))                  # (B, B)
    d_pos = jnp.diagonal(dist)
    masked = jnp.where(jnp.eye(B, dtype=bool), jnp.inf, dist)
    d_neg = jnp.min(masked, axis=-1)
    return jnp.mean(jnp.maximum(d_pos - d_neg + margin, 0.0))


if __name__ == "__main__":
    key = jax.random.PRNGKey(0)
    k1, k2, k3, k4 = jax.random.split(key, 4)

    # --- small smoke test (single-tile path) -------------------------------
    batch, dim = 8, 32
    img = jax.random.normal(k1, (batch, dim), dtype=jnp.float32)
    txt = jax.random.normal(k2, (batch, dim), dtype=jnp.float32)
    logit_scale = jnp.float32(100.0)               # unused, as in the module
    labels = jnp.arange(batch, dtype=jnp.int32)    # unused, as in the module
    out = triplet_loss_pallas(img, txt, logit_scale, labels, margin=1.0)
    loss = jax.block_until_ready(out['triplet_loss'])
    ref = _triplet_loss_ref(img, txt, margin=1.0)
    assert jnp.allclose(loss, ref, atol=1e-4, rtol=1e-4), (loss, ref)

    # --- multi-tile test with padding: exercises the accumulator across the
    # reduction axis plus the diagonal / padded-column masked branches and
    # the unmasked fast path.
    batch2, dim2 = 200, 64
    img2 = jax.random.normal(k3, (batch2, dim2), dtype=jnp.float32)
    txt2 = jax.random.normal(k4, (batch2, dim2), dtype=jnp.float32)
    out2 = triplet_loss_pallas(img2, txt2, margin=1.0, tm=128, tn=128)
    loss2 = jax.block_until_ready(out2['triplet_loss'])
    ref2 = _triplet_loss_ref(img2, txt2, margin=1.0)
    assert jnp.allclose(loss2, ref2, atol=1e-4, rtol=1e-4), (loss2, ref2)

    print("KERNEL_OK")
</pallas_src>

<mosaic_0001>
module attributes {stable_mosaic.version = 11 : i64} {
  func.func @_dneg_sq_kernel(%arg0: i32, %arg1: i32, %arg2: memref<8x32xf32, #tpu.memory_space<vmem>>, %arg3: memref<8x32xf32, #tpu.memory_space<vmem>>, %arg4: memref<8x1xf32, #tpu.memory_space<vmem>>, %arg5: memref<1x8xf32, #tpu.memory_space<vmem>>, %arg6: memref<8x1xf32, #tpu.memory_space<vmem>>) attributes {dimension_semantics = [#tpu.dimension_semantics<parallel>, #tpu.dimension_semantics<arbitrary>], iteration_bounds = array<i64: 1, 1>, scalar_prefetch = 0 : i64, scratch_operands = 0 : i64, tpu.core_type = #tpu.core_type<tc>, window_params = [{transform_indices = @transform_0, window_bounds = array<i64: 8, 32>}, {transform_indices = @transform_1, window_bounds = array<i64: 8, 32>}, {transform_indices = @transform_2, window_bounds = array<i64: 8, 1>}, {transform_indices = @transform_3, window_bounds = array<i64: 1, 8>}, {transform_indices = @transform_4, window_bounds = array<i64: 8, 1>}]} {
    %c0_i32 = arith.constant 0 : i32
    %0 = arith.cmpi eq, %arg1, %c0_i32 : i32
    %1 = arith.extui %0 : i1 to i32
    %c0_i32_0 = arith.constant 0 : i32
    %2 = arith.cmpi ne, %1, %c0_i32_0 : i32
    scf.if %2 {
      %cst_16 = arith.constant 0x7F800000 : f32
      %29 = vector.broadcast %cst_16 : f32 to vector<8x1xf32>
      %c0_17 = arith.constant 0 : index
      %c0_18 = arith.constant 0 : index
      %30 = vector.load %arg6[%c0_17, %c0_18] : memref<8x1xf32, #tpu.memory_space<vmem>>, vector<8x1xf32>
      tpu.vector_store %arg6[%c0_17, %c0_18], %29 {strides = array<i32>} : memref<8x1xf32, #tpu.memory_space<vmem>>, vector<8x1xf32>,
    } else {
    }
    %c0 = arith.constant 0 : index
    %c0_1 = arith.constant 0 : index
    %3 = vector.load %arg2[%c0, %c0_1] : memref<8x32xf32, #tpu.memory_space<vmem>>, vector<8x32xf32>
    %c0_2 = arith.constant 0 : index
    %c0_3 = arith.constant 0 : index
    %4 = vector.load %arg3[%c0_2, %c0_3] : memref<8x32xf32, #tpu.memory_space<vmem>>, vector<8x32xf32>
    %cst = arith.constant dense<0.000000e+00> : vector<8x8xf32>
    %5 = tpu.matmul %3, %4, %cst {dimension_numbers = #tpu.dot_dimension_numbers<[1], [1], [0], [0], [0, 0, 1, 0], [], []>} : vector<8x32xf32>, vector<8x32xf32>, vector<8x8xf32> -> vector<8x8xf32>
    %c0_4 = arith.constant 0 : index
    %c0_5 = arith.constant 0 : index
    %6 = vector.load %arg5[%c0_4, %c0_5] : memref<1x8xf32, #tpu.memory_space<vmem>>, vector<1x8xf32>
    %cst_6 = arith.constant 2.000000e+00 : f32
    %7 = vector.broadcast %cst_6 : f32 to vector<8x8xf32>
    %8 = arith.mulf %7, %5 : vector<8x8xf32>
    %9 = vector.broadcast %6 : vector<1x8xf32> to vector<8x8xf32>
    %10 = arith.subf %9, %8 : vector<8x8xf32>
    %c0_7 = arith.constant 0 : index
    %c0_8 = arith.constant 0 : index
    %11 = vector.load %arg4[%c0_7, %c0_8] : memref<8x1xf32, #tpu.memory_space<vmem>>, vector<8x1xf32>
    %12 = vector.broadcast %11 : vector<8x1xf32> to vector<8x8xf32>
    %13 = arith.addf %10, %12 : vector<8x8xf32>
    %c8_i32 = arith.constant 8 : i32
    %14 = arith.muli %arg0, %c8_i32 : i32
    %c8_i32_9 = arith.constant 8 : i32
    %15 = arith.muli %arg1, %c8_i32_9 : i32
    %c8_i32_10 = arith.constant 8 : i32
    %16 = arith.addi %15, %c8_i32_10 : i32
    %17 = arith.cmpi slt, %14, %16 : i32
    %c8_i32_11 = arith.constant 8 : i32
    %18 = arith.addi %14, %c8_i32_11 : i32
    %19 = arith.cmpi slt, %15, %18 : i32
    %20 = arith.andi %17, %19 : i1
    %c8_i32_12 = arith.constant 8 : i32
    %21 = arith.addi %15, %c8_i32_12 : i32
    %c8_i32_13 = arith.constant 8 : i32
    %22 = arith.cmpi sgt, %21, %c8_i32_13 : i32
    %23 = arith.ori %20, %22 : i1
    %24 = arith.extui %23 : i1 to i32
    %c0_i32_14 = arith.constant 0 : i32
    %25 = arith.cmpi ne, %24, %c0_i32_14 : i32
    scf.if %25 {
      %29 = tpu.iota {dimensions = array<i32: 0>} : vector<8x8xi32>
      %30 = vector.broadcast %14 : i32 to vector<8x8xi32>
      %31 = arith.addi %30, %29 : vector<8x8xi32>
      %32 = tpu.iota {dimensions = array<i32: 1>} : vector<8x8xi32>
      %33 = vector.broadcast %15 : i32 to vector<8x8xi32>
      %34 = arith.addi %33, %32 : vector<8x8xi32>
      %35 = arith.cmpi eq, %31, %34 : vector<8x8xi32>
      %c8_i32_16 = arith.constant 8 : i32
      %36 = vector.broadcast %c8_i32_16 : i32 to vector<8x8xi32>
      %37 = arith.cmpi sge, %34, %36 : vector<8x8xi32>
      %38 = arith.ori %35, %37 : vector<8x8xi1>
      %cst_17 = arith.constant 0x7F800000 : f32
      %39 = vector.broadcast %cst_17 : f32 to vector<8x8xf32>
      %40 = arith.select %38, %39, %13 : vector<8x8xi1>, vector<8x8xf32>
      %c0_18 = arith.constant 0 : index
      %c0_19 = arith.constant 0 : index
      %41 = vector.load %arg6[%c0_18, %c0_19] : memref<8x1xf32, #tpu.memory_space<vmem>>, vector<8x1xf32>
      %cst_20 = arith.constant dense<0x7F800000> : vector<8xf32>
      %42 = vector.multi_reduction <minimumf>, %40, %cst_20 [1] : vector<8x8xf32> to vector<8xf32>
      %43 = vector.shape_cast %42 : vector<8xf32> to vector<8x1xf32>
      %44 = arith.minimumf %41, %43 : vector<8x1xf32>
      %c0_21 = arith.constant 0 : index
      %c0_22 = arith.constant 0 : index
      %45 = vector.load %arg6[%c0_21, %c0_22] : memref<8x1xf32, #tpu.memory_space<vmem>>, vector<8x1xf32>
      tpu.vector_store %arg6[%c0_21, %c0_22], %44 {strides = array<i32>} : memref<8x1xf32, #tpu.memory_space<vmem>>, vector<8x1xf32>,
    } else {
    }
    %true = arith.constant true
    %26 = arith.xori %23, %true : i1
    %27 = arith.extui %26 : i1 to i32
    %c0_i32_15 = arith.constant 0 : i32
    %28 = arith.cmpi ne, %27, %c0_i32_15 : i32
    scf.if %28 {
      %c0_16 = arith.constant 0 : index
      %c0_17 = arith.constant 0 : index
      %29 = vector.load %arg6[%c0_16, %c0_17] : memref<8x1xf32, #tpu.memory_space<vmem>>, vector<8x1xf32>
      %cst_18 = arith.constant dense<0x7F800000> : vector<8xf32>
      %30 = vector.multi_reduction <minimumf>, %13, %cst_18 [1] : vector<8x8xf32> to vector<8xf32>
      %31 = vector.shape_cast %30 : vector<8xf32> to vector<8x1xf32>
      %32 = arith.minimumf %29, %31 : vector<8x1xf32>
      %c0_19 = arith.constant 0 : index
      %c0_20 = arith.constant 0 : index
      %33 = vector.load %arg6[%c0_19, %c0_20] : memref<8x1xf32, #tpu.memory_space<vmem>>, vector<8x1xf32>
      tpu.vector_store %arg6[%c0_19, %c0_20], %32 {strides = array<i32>} : memref<8x1xf32, #tpu.memory_space<vmem>>, vector<8x1xf32>,
    } else {
    }
    return
  }
  func.func @transform_0(%arg0: i32, %arg1: i32) -> (i32, i32) {
    %c0_i32 = arith.constant 0 : i32
    %c0_i32_0 = arith.constant 0 : i32
    return %arg0, %c0_i32 : i32, i32
  }
  func.func @transform_1(%arg0: i32, %arg1: i32) -> (i32, i32) {
    %c0_i32 = arith.constant 0 : i32
    %c0_i32_0 = arith.constant 0 : i32
    return %arg1, %c0_i32 : i32, i32
  }
  func.func @transform_2(%arg0: i32, %arg1: i32) -> (i32, i32) {
    %c0_i32 = arith.constant 0 : i32
    %c0_i32_0 = arith.constant 0 : i32
    return %arg0, %c0_i32 : i32, i32
  }
  func.func @transform_3(%arg0: i32, %arg1: i32) -> (i32, i32) {
    %c0_i32 = arith.constant 0 : i32
    %c0_i32_0 = arith.constant 0 : i32
    return %c0_i32, %arg1 : i32, i32
  }
  func.func @transform_4(%arg0: i32, %arg1: i32) -> (i32, i32) {
    %c0_i32 = arith.constant 0 : i32
    %c0_i32_0 = arith.constant 0 : i32
    return %arg0, %c0_i32 : i32, i32
  }
}

</mosaic_0001>

<llo_original>
// kernel: tpu_custom_call.1
$region0: #{tpu_custom_call.1}
  #allocation0 [shape = 'u32[]', space=smem, size = 0x4, offset = 0x4, fixed_abs, tag = 'smem constant byte address 0x4 - core index']
  #allocation1 [shape = 'u32[144,128]{1,0:T(1,128)}', space=vmem, size = 0x12000, scoped, tag = 'internal scratch']
  %s0 = inlined_call_operand.vmem [shape: f32[8,32], index: 0, kind: input, shape index: {}]
  %s1 = inlined_call_operand.hbm [shape: f32[8,32], index: 1, kind: input, shape index: {}]
  %s2 = inlined_call_operand.vmem [shape: f32[8,1], index: 2, kind: input, shape index: {}]
  %s3 = inlined_call_operand.vmem [shape: f32[1,8], index: 3, kind: input, shape index: {}]
  %s4 = inlined_call_operand.vmem [shape: f32[8,1], index: 4, kind: output, shape index: {}]
  %s5 = sld [smem:[#allocation0]]
  $region42: #{tpu_custom_call.1} parent=0
    _
  %s7 = ssub.s32 1, %s5
  %s8 = scalar_select 0, %s7, %s5
  $region1: #{tpu_custom_call.1} parent=0
    #allocation2 [shape = 'u8[4096]{0}', space=vmem, size = 0x1000, scoped, tag = 'input window, operand 1, single buffered']
    #allocation3 [shape = 's32[1]{0}', space=sflag, size = 0x4, scoped, tag = 'scoped memory for tpu_custom_call.1']
    %9 = vsyncpa [#allocation3], 0
    // Predicated region
    $region2: #{tpu_custom_call.1} parent=1 // pred_check
      _
    $region3: #{tpu_custom_call.1} parent=1 // pred_check_branch
      %11 = sbr.rel (0) target = $region5
    $region4: #{tpu_custom_call.1} parent=1 // pred_region
      _
    $region5: #{tpu_custom_call.1} parent=1 // pred_fallthru
      _
    // Predicated region
    $region6: #{tpu_custom_call.1} parent=1 // pred_check
      _
    $region7: #{tpu_custom_call.1} parent=1 // pred_check_branch
      %13 = sbr.rel (0) target = $region9
    $region8: #{tpu_custom_call.1} parent=1 // pred_region
      %s15 = ssub.s32 128, 128
      %16 = vsyncadd [#allocation3], %s15
      %s18 = sshll.u32 [#allocation2], 4
      %s19 = int_to_ptr.vmem [resolvable:$true] %s18
      %21 = dma.hbm_to_vmem [thread:$0]  %s1, 128, %s19, [#allocation3]
    $region9: #{tpu_custom_call.1} parent=1 // pred_fallthru
      _
    // Predicated region
    $region10: #{tpu_custom_call.1} parent=1 // pred_check
      _
    $region11: #{tpu_custom_call.1} parent=1 // pred_check_branch
      %23 = sbr.rel (0) target = $region13
    $region12: #{tpu_custom_call.1} parent=1 // pred_region
      _
    $region13: #{tpu_custom_call.1} parent=1 // pred_fallthru
      _
    // Predicated region
    $region14: #{tpu_custom_call.1} parent=1 // pred_check
      _
    $region15: #{tpu_custom_call.1} parent=1 // pred_check_branch
      %25 = sbr.rel (0) target = $region17
    $region16: #{tpu_custom_call.1} parent=1 // pred_region
      _
    $region17: #{tpu_custom_call.1} parent=1 // pred_fallthru
      _
    // Predicated region
    $region18: #{tpu_custom_call.1} parent=1 // pred_check
      _
    $region19: #{tpu_custom_call.1} parent=1 // pred_check_branch
      %27 = sbr.rel (0) target = $region21
    $region20: #{tpu_custom_call.1} parent=1 // pred_region
      %28 = dma.done [#allocation3], 128
    $region21: #{tpu_custom_call.1} parent=1 // pred_fallthru
      _
    %p29 = scmp.eq.s32.totalorder 0, 0
    // Predicated region
    $region22: #{tpu_custom_call.1} parent=1 // pred_check
      %p30 = pneg %p29
    $region23: #{tpu_custom_call.1} parent=1 // pred_check_branch
      %32 = sbr.rel (%p30) target = $region25
    $region24: #{tpu_custom_call.1} parent=1 // pred_region
      %vm33 = vcmask 7168
      %34 = vst.msk [vmem:[%s4] sm:$0xff] %vm33, inf
    $region25: #{tpu_custom_call.1} parent=1 // pred_fallthru
      _
    %v35 = vld [vmem:[%s0] sm:$0xff]
    %v36 = vld [vmem:[#allocation2] sm:$0xff]
    %vm37 = vcmask 261120
    %v39 = vsel %vm37, %v35, 0
    %v42 = vsel %vm37, %v36, 0
    %44 = vmatprep.subr.mxu0 0.0
    %45 = vmatpush1.xpose.msra.mxu0 0.0
    %46 = vmatprep.subr.mxu0 0.0
    %47 = vmatpush1.xpose.msra.mxu0 0.0
    %48 = vmatprep.subr.mxu0 0.0
    %49 = vmatpush1.xpose.msra.mxu0 0.0
    %50 = vmatprep.subr.mxu0 0.0
    %51 = vmatpush1.xpose.msra.mxu0 0.0
    %52 = vmatprep.subr.mxu0 0.0
    %53 = vmatpush1.xpose.msra.mxu0 0.0
    %54 = vmatprep.subr.mxu0 0.0
    %55 = vmatpush1.xpose.msra.mxu0 0.0
    %56 = vmatprep.subr.mxu0 0.0
    %57 = vmatpush1.xpose.msra.mxu0 0.0
    %58 = vmatprep.subr.mxu0 0.0
    %59 = vmatpush1.xpose.msra.mxu0 0.0
    %60 = vmatprep.subr.mxu0 0.0
    %61 = vmatpush1.xpose.msra.mxu0 0.0
    %62 = vmatprep.subr.mxu0 0.0
    %63 = vmatpush1.xpose.msra.mxu0 0.0
    %64 = vmatprep.subr.mxu0 0.0
    %65 = vmatpush1.xpose.msra.mxu0 0.0
    %66 = vmatprep.subr.mxu0 0.0
    %67 = vmatpush1.xpose.msra.mxu0 0.0
    %68 = vmatprep.subr.mxu0 0.0
    %69 = vmatpush1.xpose.msra.mxu0 0.0
    %70 = vmatprep.subr.mxu0 0.0
    %71 = vmatpush1.xpose.msra.mxu0 0.0
    %72 = vmatprep.subr.mxu0 0.0
    %73 = vmatpush1.xpose.msra.mxu0 0.0
    %74 = vmatprep.subr.mxu0 0.0
    %75 = vmatpush1.xpose.msra.mxu0 %v42
    %76 = vmatprep.subr.mxu0 0.0
    %77 = vmatpush2.xpose.msra.mxu0 0.0
    %78 = vmatprep.subr.mxu0 0.0
    %79 = vmatpush2.xpose.msra.mxu0 0.0
    %80 = vmatprep.subr.mxu0 0.0
    %81 = vmatpush2.xpose.msra.mxu0 0.0
    %82 = vmatprep.subr.mxu0 0.0
    %83 = vmatpush2.xpose.msra.mxu0 0.0
    %84 = vmatprep.subr.mxu0 0.0
    %85 = vmatpush2.xpose.msra.mxu0 0.0
    %86 = vmatprep.subr.mxu0 0.0
    %87 = vmatpush2.xpose.msra.mxu0 0.0
    %88 = vmatprep.subr.mxu0 0.0
    %89 = vmatpush2.xpose.msra.mxu0 0.0
    %90 = vmatprep.subr.mxu0 0.0
    %91 = vmatpush2.xpose.msra.mxu0 0.0
    %92 = vmatprep.subr.mxu0 0.0
    %93 = vmatpush2.xpose.msra.mxu0 0.0
    %94 = vmatprep.subr.mxu0 0.0
    %95 = vmatpush2.xpose.msra.mxu0 0.0
    %96 = vmatprep.subr.mxu0 0.0
    %97 = vmatpush2.xpose.msra.mxu0 0.0
    %98 = vmatprep.subr.mxu0 0.0
    %99 = vmatpush2.xpose.msra.mxu0 0.0
    %100 = vmatprep.subr.mxu0 0.0
    %101 = vmatpush2.xpose.msra.mxu0 0.0
    %102 = vmatprep.subr.mxu0 0.0
    %103 = vmatpush2.xpose.msra.mxu0 0.0
    %104 = vmatprep.subr.mxu0 0.0
    %105 = vmatpush2.xpose.msra.mxu0 0.0
    %106 = vmatprep.subr.mxu0 0.0
    %107 = vmatpush2.xpose.msra.mxu0 0.0
    %108 = vmatprep.mubr.f32.mxu0 0.0
    %109 = vmatmul.mubr.f32.gmra.mxu0 %v39
    %v110 = vpop.f32.mrf.mxu0
    %v111 = vadd.f32 0.0, %v110
    %v112 = vpop.f32.mrf.mxu0
    %113 = vdwg.mxu0
    %v114 = vld [vmem:[%s3] sm:$0x1]
    %v115 = vmul.f32 %v111, 2.0
    %v117 = vlaneseq
    %v118 = vshrl.u32 %v117, 7
    %v119 = vsub.s32 0, %v118
    %v120 = vrot.slane %v114, %v119
    %v122 = vsub.f32 %v120, %v115
    %v123 = vld [vmem:[%s2] sm:$0xff]
    %125 = vset.pattern.permute.xlu0 0
    %126 = vperm.xlu0 %125, %v123
    %v127 = vpop.permute.xlu0 %126
    %v129 = vadd.f32 %v122, %v127
    %s130 = smul.u32 0, 8
    %s131 = smul.u32 0, 8
    %s132 = sadd.s32 %s131, 8
    %p133 = scmp.lt.s32.totalorder %s130, %s132
    %s134 = sadd.s32 %s130, 8
    %p135 = scmp.lt.s32.totalorder %s131, %s134
    %p136 = pnand %p133, %p135
    %p137 = pneg %p136
    %p138 = scmp.gt.s32.totalorder %s132, 8
    %p139 = por %p137, %p138
    // Predicated region
    $region26: #{tpu_custom_call.1} parent=1 // pred_check
      %p140 = pneg %p139
    $region27: #{tpu_custom_call.1} parent=1 // pred_check_branch
      %142 = sbr.rel (%p140) target = $region29
    $region28: #{tpu_custom_call.1} parent=1 // pred_region
      %v143 = vlaneseq
      %v144 = vshrl.u32 %v143, 7
      %v145 = vstv %s130
      %v146 = vadd.s32 %v145, %v144
      %v147 = vlaneseq
      %v148 = vand.u32 %v147, 127
      %v149 = vstv %s131
      %v150 = vadd.s32 %v149, %v148
      %vm151 = vcmp.eq.s32.totalorder %v146, %v150
      %vm152 = vcmp.ge.s32.totalorder %v150, 8
      %vm153 = vmor %vm151, %vm152
      %v154 = vsel %vm153, inf, %v129
      %v155 = vld [vmem:[%s4] sm:$0xff]
      %vm156 = vcmask 64512
      %v157 = vsel %vm156, %v154, inf
      %158 = vmin.xlane.f32.xlu0 %v157
      %v159 = vpop.xlane.xlu0 %158
      %v160 = vmin.f32 %v155, %v159
      %vm161 = vcmask 7168
      %162 = vst.msk [vmem:[%s4] sm:$0xff] %vm161, %v160
    $region29: #{tpu_custom_call.1} parent=1 // pred_fallthru
      _
    %p163 = pneg %p139
    // Predicated region
    $region30: #{tpu_custom_call.1} parent=1 // pred_check
      _
    $region31: #{tpu_custom_call.1} parent=1 // pred_check_branch
      %165 = sbr.rel (%p139) target = $region33
    $region32: #{tpu_custom_call.1} parent=1 // pred_region
      %v166 = vld [vmem:[%s4] sm:$0xff]
      %vm167 = vcmask 64512
      %v168 = vsel %vm167, %v129, inf
      %169 = vmin.xlane.f32.xlu0 %v168
      %v170 = vpop.xlane.xlu0 %169
      %v171 = vmin.f32 %v166, %v170
      %vm172 = vcmask 7168
      %173 = vst.msk [vmem:[%s4] sm:$0xff] %vm172, %v171
    $region33: #{tpu_custom_call.1} parent=1 // pred_fallthru
      _
    // Predicated region
    $region34: #{tpu_custom_call.1} parent=1 // pred_check
      _
    $region35: #{tpu_custom_call.1} parent=1 // pred_check_branch
      %175 = sbr.rel (0) target = $region37
    $region36: #{tpu_custom_call.1} parent=1 // pred_region
      _
    $region37: #{tpu_custom_call.1} parent=1 // pred_fallthru
      _
    // Predicated region
    $region38: #{tpu_custom_call.1} parent=1 // pred_check
      _
    $region39: #{tpu_custom_call.1} parent=1 // pred_check_branch
      %177 = sbr.rel (0) target = $region41
    $region40: #{tpu_custom_call.1} parent=1 // pred_region
      _
    $region41: #{tpu_custom_call.1} parent=1 // pred_fallthru
      _
    %178 = vsyncpa [#allocation3], 1

</llo_original>
